<compile_context>
chip_gen: v6e
topology: v6e:2x2x1
jax: 0.10.0
libtpu: 0.0.40
codegen_flags: <defaults>
</compile_context>

<pallas_src>
import functools
import math

import jax
import jax.numpy as jnp
from jax import lax
from jax.experimental import pallas as pl
from jax.experimental.pallas import tpu as pltpu

_GROUP = 8  # sublane group size: one dense (8, D) store per group


def _round_up(x, m):
    return ((x + m - 1) // m) * m


def _pick_tok_tile(n, max_tile):
    """Pick a sublane-aligned token tile, preferring one that divides n exactly
    (avoids padding + the padded-output slice copy in the wrapper)."""
    max_tile = max(8, max_tile - max_tile % 8)
    if n % 8 == 0:
        start = min(max_tile, n)
        for t in range(start, 7, -8):
            if n % t == 0:
                if t >= min(128, n):
                    return t, n          # exact tiling, no padding
                break
    t = min(max_tile, _round_up(n, 8))
    n_pad = _round_up(n, t)
    return t, n_pad


def _vmem_capacity_bytes():
    """Physical per-core VMEM; fall back to v7x's 64 MiB if query unavailable."""
    try:
        info = pltpu.get_tpu_info()
        cap = getattr(info, "vmem_capacity_bytes", None)
        if cap:
            return int(cap)
    except Exception:
        pass
    return 64 << 20


# --------------------------------------------------------------------------
# Path 1: one-hot MXU lookup (small vocab, VMEM-resident table)
# --------------------------------------------------------------------------
def _embed_onehot_kernel(ids_ref, table_ref, out_ref, *, scale, vocab):
    """ids_ref: (tok_tile, 1) int32 VMEM block; table_ref: (V, D) VMEM-resident;
    out_ref: (tok_tile, D)."""
    tok_tile = out_ref.shape[0]
    ids = jnp.clip(ids_ref[...], 0, vocab - 1)                      # (tok_tile, 1)
    one_hot = (lax.broadcasted_iota(jnp.int32, (tok_tile, vocab), 1)
               == ids).astype(table_ref.dtype)                      # (tok_tile, V)
    emb = jnp.dot(one_hot, table_ref[...],
                  preferred_element_type=jnp.float32)                # MXU, f32 acc
    out_ref[...] = (emb * scale).astype(out_ref.dtype)               # scale in f32


def _run_onehot(ids, table, *, tok_tile, n_tiles, scale, vmem_limit):
    V, D = table.shape
    n_pad = ids.shape[0]
    ids2d = ids.reshape(n_pad, 1)
    kernel = functools.partial(_embed_onehot_kernel, scale=scale, vocab=V)

    def call(table_pipeline_mode):
        if table_pipeline_mode is None:
            table_spec = pl.BlockSpec((V, D), lambda i: (0, 0))
        else:
            # Constant block index across the grid -> single-buffer the table.
            table_spec = pl.BlockSpec((V, D), lambda i: (0, 0),
                                      pipeline_mode=table_pipeline_mode)
        return pl.pallas_call(
            kernel,
            out_shape=jax.ShapeDtypeStruct((n_pad, D), table.dtype),
            grid=(n_tiles,),
            in_specs=[
                pl.BlockSpec((tok_tile, 1), lambda i: (i, 0)),   # per-tile ids (VMEM)
                table_spec,                                      # resident table
            ],
            out_specs=pl.BlockSpec((tok_tile, D), lambda i: (i, 0)),
            compiler_params=pltpu.CompilerParams(
                dimension_semantics=("parallel",),
                vmem_limit_bytes=int(vmem_limit),
            ),
        )(ids2d, table)

    try:
        return call(pl.Buffered(1))
    except Exception:
        # pipeline_mode not supported by this jax version -> default buffering.
        return call(None)


# --------------------------------------------------------------------------
# Path 2: manual DMA row-gather (large vocab, table stays in HBM)
# --------------------------------------------------------------------------
def _embed_dma_gather_kernel(ids_ref, table_hbm, out_ref, row_buf, sem,
                             *, tok_tile, scale, vocab):
    """ids_ref: (N,) int32 in SMEM (scalar prefetch); table_hbm: (V, D) in HBM;
    out_ref: (tok_tile, D); row_buf: (2*_GROUP, D) VMEM; sem: DMA sems (2*_GROUP,)."""
    tile_base = pl.program_id(0) * tok_tile
    n_groups = tok_tile // _GROUP

    def row_copy(slot, r, tok):
        dst_row = slot * _GROUP + r
        return pltpu.make_async_copy(
            table_hbm.at[pl.ds(tok, 1), :],
            row_buf.at[pl.ds(dst_row, 1), :],
            sem.at[dst_row])

    def fetch_group(g, slot):
        base = tile_base + g * _GROUP
        for r in range(_GROUP):
            tok = jnp.clip(ids_ref[base + r], 0, vocab - 1)
            row_copy(slot, r, tok).start()

    fetch_group(0, 0)

    def body(g, carry):
        slot = lax.rem(g, 2)
        # Wait for this group's 8 row DMAs (descriptor shape matches the start).
        for r in range(_GROUP):
            row_copy(slot, r, 0).wait()

        # Prefetch next group into the other buffer slot while we compute.
        @pl.when(g + 1 < n_groups)
        def _():
            fetch_group(g + 1, 1 - slot)

        buf_start = pl.multiple_of(slot * _GROUP, _GROUP)
        rows = row_buf[pl.ds(buf_start, _GROUP), :].astype(jnp.float32) * scale
        out_start = pl.multiple_of(g * _GROUP, _GROUP)
        out_ref[pl.ds(out_start, _GROUP), :] = rows.astype(out_ref.dtype)
        return carry

    lax.fori_loop(0, n_groups, body, 0)


def _run_dma_gather(ids, table, *, tok_tile, n_tiles, scale):
    V, D = table.shape
    n_pad = ids.shape[0]
    itemsize = jnp.dtype(table.dtype).itemsize
    kernel = functools.partial(_embed_dma_gather_kernel, tok_tile=tok_tile,
                               scale=scale, vocab=V)
    needed = (2 * tok_tile * D * itemsize          # double-buffered output tiles
              + 2 * _GROUP * D * itemsize          # row gather buffer
              + (4 << 20))
    # TODO(synk): for very large N (> ~256K tokens) tile the ids into SMEM per grid
    # step instead of scalar-prefetching them all (1-D SMEM pads to next_pow2(4N)).
    return pl.pallas_call(
        kernel,
        out_shape=jax.ShapeDtypeStruct((n_pad, D), table.dtype),
        grid_spec=pltpu.PrefetchScalarGridSpec(
            num_scalar_prefetch=1,                         # token ids -> SMEM
            grid=(n_tiles,),
            in_specs=[pl.BlockSpec(memory_space=pl.ANY)],  # table stays in HBM
            out_specs=pl.BlockSpec((tok_tile, D), lambda i, ids_ref: (i, 0)),
            scratch_shapes=[
                pltpu.VMEM((2 * _GROUP, D), table.dtype),
                pltpu.SemaphoreType.DMA((2 * _GROUP,)),
            ],
        ),
        compiler_params=pltpu.CompilerParams(
            dimension_semantics=("parallel",),
            vmem_limit_bytes=int(min(max(needed, 32 << 20), 128 << 20)),
        ),
    )(ids, table)


# --------------------------------------------------------------------------
# Wrapper (path selection)
# --------------------------------------------------------------------------
def embedding_layer(tokens, table, *, tok_tile=512, force_path=None):
    """tokens: int array of any shape, table: (V, D) -> tokens.shape + (D,) scaled
    by sqrt(D). force_path in {None, "onehot", "dma"} (None = auto-select)."""
    lead_shape = tokens.shape
    V, D = table.shape
    N = 1
    for s in lead_shape:
        N *= int(s)
    scale = math.sqrt(D)
    itemsize = jnp.dtype(table.dtype).itemsize

    tok_tile, n_pad = _pick_tok_tile(N, tok_tile)
    n_tiles = n_pad // tok_tile

    ids = tokens.reshape(N).astype(jnp.int32)
    if n_pad != N:
        ids = jnp.pad(ids, (0, n_pad - N))       # padded slots read row 0 (sliced off)

    vmem_cap = _vmem_capacity_bytes()
    onehot_bytes = (V * D * itemsize                 # resident table (single-buffered)
                    + 2 * tok_tile * D * itemsize    # double-buffered output tiles
                    + 2 * tok_tile * 128 * 4         # id tiles (lane-padded)
                    + tok_tile * max(V, 128) * 4     # one-hot intermediate
                    + (4 << 20))
    use_onehot = (V <= 2048) and (onehot_bytes <= vmem_cap - (8 << 20))
    if force_path == "onehot":
        use_onehot = True
    elif force_path == "dma":
        use_onehot = False
    # TODO(synk): add a third path (VMEM-resident table + vectorized 8-row gather)
    # for the middle regime where V > 2048 but the table still fits in VMEM.

    if use_onehot:
        vmem_limit = min(max(onehot_bytes, 32 << 20), vmem_cap)
        out_flat = _run_onehot(ids, table, tok_tile=tok_tile, n_tiles=n_tiles,
                               scale=scale, vmem_limit=vmem_limit)
    else:
        out_flat = _run_dma_gather(ids, table, tok_tile=tok_tile, n_tiles=n_tiles,
                                   scale=scale)

    if n_pad != N:
        out_flat = out_flat[:N]
    return out_flat.reshape(*lead_shape, D)


def embedding_layer_ref(tokens, table):
    """Pure-JAX reference (jnp.take clips ids, matching the in-kernel clamp)."""
    D = table.shape[1]
    return jnp.take(table, tokens, axis=0) * math.sqrt(D)


if __name__ == "__main__":
    vocab = 32
    d_model = 128   # lane-aligned last dim
    B, S = 2, 8

    key = jax.random.PRNGKey(0)
    k_tok, k_tab = jax.random.split(key)

    tokens = jax.random.randint(k_tok, (B, S), 0, vocab, dtype=jnp.int32)
    # deterministic synthetic embedding table (stands in for nn.Embedding weights)
    table = jax.random.normal(k_tab, (vocab, d_model), dtype=jnp.float32)

    ref = embedding_layer_ref(tokens, table)

    # Auto path (small vocab -> one-hot MXU path).
    out = embedding_layer(tokens, table)
    out = jax.block_until_ready(out)
    assert out.shape == (B, S, d_model), out.shape
    assert jnp.allclose(out, ref, atol=1e-5, rtol=1e-5), "one-hot path mismatch"

    # Also exercise the large-vocab DMA-gather path on the same small inputs.
    out_dma = embedding_layer(tokens, table, force_path="dma")
    out_dma = jax.block_until_ready(out_dma)
    assert jnp.allclose(out_dma, ref, atol=1e-5, rtol=1e-5), "DMA path mismatch"

    print("KERNEL_OK")
</pallas_src>

<mosaic_0001>
module attributes {stable_mosaic.version = 11 : i64} {
  func.func @_embed_onehot_kernel(%arg0: i32, %arg1: memref<16x1xi32, #tpu.memory_space<vmem>>, %arg2: memref<32x128xf32, #tpu.memory_space<vmem>>, %arg3: memref<16x128xf32, #tpu.memory_space<vmem>>) attributes {dimension_semantics = [#tpu.dimension_semantics<parallel>], iteration_bounds = array<i64: 1>, scalar_prefetch = 0 : i64, scratch_operands = 0 : i64, tpu.core_type = #tpu.core_type<tc>, window_params = [{transform_indices = @transform_0, window_bounds = array<i64: 16, 1>}, {pipeline_mode = #tpu.pipeline_mode<synchronous>, transform_indices = @transform_1, window_bounds = array<i64: 32, 128>}, {transform_indices = @transform_2, window_bounds = array<i64: 16, 128>}]} {
    %c0 = arith.constant 0 : index
    %c0_0 = arith.constant 0 : index
    %0 = vector.load %arg1[%c0, %c0_0] : memref<16x1xi32, #tpu.memory_space<vmem>>, vector<16x1xi32>
    %c0_i32 = arith.constant 0 : i32
    %c31_i32 = arith.constant 31 : i32
    %1 = vector.broadcast %c0_i32 : i32 to vector<16x1xi32>
    %2 = arith.maxsi %1, %0 : vector<16x1xi32>
    %3 = vector.broadcast %c31_i32 : i32 to vector<16x1xi32>
    %4 = arith.minsi %3, %2 : vector<16x1xi32>
    %5 = tpu.iota {dimensions = array<i32: 1>} : vector<16x32xi32>
    %6 = vector.broadcast %4 : vector<16x1xi32> to vector<16x32xi32>
    %7 = arith.cmpi eq, %5, %6 : vector<16x32xi32>
    %8 = arith.extui %7 : vector<16x32xi1> to vector<16x32xi32>
    %9 = arith.sitofp %8 : vector<16x32xi32> to vector<16x32xf32>
    %c0_1 = arith.constant 0 : index
    %c0_2 = arith.constant 0 : index
    %10 = vector.load %arg2[%c0_1, %c0_2] : memref<32x128xf32, #tpu.memory_space<vmem>>, vector<32x128xf32>
    %cst = arith.constant dense<0.000000e+00> : vector<16x128xf32>
    %11 = tpu.matmul %9, %10, %cst {dimension_numbers = #tpu.dot_dimension_numbers<[1], [0], [0], [1], [0, 0, 1, 1], [], []>} : vector<16x32xf32>, vector<32x128xf32>, vector<16x128xf32> -> vector<16x128xf32>
    %cst_3 = arith.constant 11.3137083 : f32
    %12 = vector.broadcast %cst_3 : f32 to vector<16x128xf32>
    %13 = arith.mulf %11, %12 : vector<16x128xf32>
    %c0_4 = arith.constant 0 : index
    %c0_5 = arith.constant 0 : index
    %14 = vector.load %arg3[%c0_4, %c0_5] : memref<16x128xf32, #tpu.memory_space<vmem>>, vector<16x128xf32>
    tpu.vector_store %arg3[%c0_4, %c0_5], %13 {strides = array<i32>} : memref<16x128xf32, #tpu.memory_space<vmem>>, vector<16x128xf32>,
    return
  }
  func.func @transform_0(%arg0: i32) -> (i32, i32) {
    %c0_i32 = arith.constant 0 : i32
    %c0_i32_0 = arith.constant 0 : i32
    return %arg0, %c0_i32 : i32, i32
  }
  func.func @transform_1(%arg0: i32) -> (i32, i32) {
    %c0_i32 = arith.constant 0 : i32
    %c0_i32_0 = arith.constant 0 : i32
    %c0_i32_1 = arith.constant 0 : i32
    return %c0_i32, %c0_i32_0 : i32, i32
  }
  func.func @transform_2(%arg0: i32) -> (i32, i32) {
    %c0_i32 = arith.constant 0 : i32
    %c0_i32_0 = arith.constant 0 : i32
    return %arg0, %c0_i32 : i32, i32
  }
}

module attributes {stable_mosaic.version = 11 : i64} {
  func.func @_embed_onehot_kernel(%arg0: i32, %arg1: memref<16x1xi32, #tpu.memory_space<vmem>>, %arg2: memref<32x128xf32, #tpu.memory_space<vmem>>, %arg3: memref<16x128xf32, #tpu.memory_space<vmem>>) attributes {dimension_semantics = [#tpu.dimension_semantics<parallel>], iteration_bounds = array<i64: 1>, scalar_prefetch = 0 : i64, scratch_operands = 0 : i64, tpu.core_type = #tpu.core_type<tc>, window_params = [{transform_indices = @transform_0, window_bounds = array<i64: 16, 1>}, {pipeline_mode = #tpu.pipeline_mode<synchronous>, transform_indices = @transform_1, window_bounds = array<i64: 32, 128>}, {transform_indices = @transform_2, window_bounds = array<i64: 16, 128>}]} {
    %c0 = arith.constant 0 : index
    %c0_0 = arith.constant 0 : index
    %0 = vector.load %arg1[%c0, %c0_0] : memref<16x1xi32, #tpu.memory_space<vmem>>, vector<16x1xi32>
    %c0_i32 = arith.constant 0 : i32
    %c31_i32 = arith.constant 31 : i32
    %1 = vector.broadcast %c0_i32 : i32 to vector<16x1xi32>
    %2 = arith.maxsi %1, %0 : vector<16x1xi32>
    %3 = vector.broadcast %c31_i32 : i32 to vector<16x1xi32>
    %4 = arith.minsi %3, %2 : vector<16x1xi32>
    %5 = tpu.iota {dimensions = array<i32: 1>} : vector<16x32xi32>
    %6 = vector.broadcast %4 : vector<16x1xi32> to vector<16x32xi32>
    %7 = arith.cmpi eq, %5, %6 : vector<16x32xi32>
    %8 = arith.extui %7 : vector<16x32xi1> to vector<16x32xi32>
    %9 = arith.sitofp %8 : vector<16x32xi32> to vector<16x32xf32>
    %c0_1 = arith.constant 0 : index
    %c0_2 = arith.constant 0 : index
    %10 = vector.load %arg2[%c0_1, %c0_2] : memref<32x128xf32, #tpu.memory_space<vmem>>, vector<32x128xf32>
    %cst = arith.constant dense<0.000000e+00> : vector<16x128xf32>
    %11 = tpu.matmul %9, %10, %cst {dimension_numbers = #tpu.dot_dimension_numbers<[1], [0], [0], [1], [0, 0, 1, 1], [], []>} : vector<16x32xf32>, vector<32x128xf32>, vector<16x128xf32> -> vector<16x128xf32>
    %cst_3 = arith.constant 11.3137083 : f32
    %12 = vector.broadcast %cst_3 : f32 to vector<16x128xf32>
    %13 = arith.mulf %11, %12 : vector<16x128xf32>
    %c0_4 = arith.constant 0 : index
    %c0_5 = arith.constant 0 : index
    %14 = vector.load %arg3[%c0_4, %c0_5] : memref<16x128xf32, #tpu.memory_space<vmem>>, vector<16x128xf32>
    tpu.vector_store %arg3[%c0_4, %c0_5], %13 {strides = array<i32>} : memref<16x128xf32, #tpu.memory_space<vmem>>, vector<16x128xf32>,
    return
  }
  func.func @transform_0(%arg0: i32) -> (i32, i32) {
    %c0_i32 = arith.constant 0 : i32
    %c0_i32_0 = arith.constant 0 : i32
    return %arg0, %c0_i32 : i32, i32
  }
  func.func @transform_1(%arg0: i32) -> (i32, i32) {
    %c0_i32 = arith.constant 0 : i32
    %c0_i32_0 = arith.constant 0 : i32
    %c0_i32_1 = arith.constant 0 : i32
    return %c0_i32, %c0_i32_0 : i32, i32
  }
  func.func @transform_2(%arg0: i32) -> (i32, i32) {
    %c0_i32 = arith.constant 0 : i32
    %c0_i32_0 = arith.constant 0 : i32
    return %arg0, %c0_i32 : i32, i32
  }
}

</mosaic_0001>

<llo_original>
// kernel: tpu_custom_call.1
$region0: #{tpu_custom_call.1}
  #allocation0 [shape = 'u32[]', space=smem, size = 0x4, offset = 0x4, fixed_abs, tag = 'smem constant byte address 0x4 - core index']
  #allocation1 [shape = 'u32[144,128]{1,0:T(1,128)}', space=vmem, size = 0x12000, scoped, tag = 'internal scratch']
  %s0 = inlined_call_operand.vmem [shape: s32[16,1], index: 0, kind: input, shape index: {}]
  %s1 = inlined_call_operand.hbm [shape: f32[32,128], index: 1, kind: input, shape index: {}]
  %s2 = inlined_call_operand.hbm [shape: f32[16,128], index: 2, kind: output, shape index: {}]
  %s3 = sld [smem:[#allocation0]]
  $region22: #{tpu_custom_call.1} parent=0
    _
  %s5 = ssub.s32 1, %s3
  %s6 = scalar_select 0, %s5, %s3
  $region1: #{tpu_custom_call.1} parent=0
    #allocation2 [shape = 'u8[16384]{0}', space=vmem, size = 0x4000, scoped, tag = 'input window, operand 1, single buffered']
    #allocation3 [shape = 's32[1]{0}', space=sflag, size = 0x4, scoped, tag = 'scoped memory for tpu_custom_call.1']
    #allocation4 [shape = 's32[1]{0}', space=sflag, size = 0x4, scoped, tag = 'scoped memory for tpu_custom_call.1']
    #allocation5 [shape = 'u8[8192]{0}', space=vmem, size = 0x2000, scoped, tag = 'output window, operand 0, single buffered']
    %7 = vsyncpa [#allocation3], 0
    %8 = vsyncpa [#allocation4], 0
    // Predicated region
    $region2: #{tpu_custom_call.1} parent=1 // pred_check
      _
    $region3: #{tpu_custom_call.1} parent=1 // pred_check_branch
      %10 = sbr.rel (0) target = $region5
    $region4: #{tpu_custom_call.1} parent=1 // pred_region
      _
    $region5: #{tpu_custom_call.1} parent=1 // pred_fallthru
      _
    // Predicated region
    $region6: #{tpu_custom_call.1} parent=1 // pred_check
      _
    $region7: #{tpu_custom_call.1} parent=1 // pred_check_branch
      %12 = sbr.rel (0) target = $region9
    $region8: #{tpu_custom_call.1} parent=1 // pred_region
      %s14 = ssub.s32 512, 512
      %15 = vsyncadd [#allocation3], %s14
      %s16 = sshll.u32 [#allocation2], 4
      %s17 = int_to_ptr.vmem [resolvable:$true] %s16
      %22 = dma.hbm_to_vmem [thread:$0]  %s1, 512, %s17, [#allocation3], 128, 128, 8
    $region9: #{tpu_custom_call.1} parent=1 // pred_fallthru
      _
    // Predicated region
    $region10: #{tpu_custom_call.1} parent=1 // pred_check
      _
    $region11: #{tpu_custom_call.1} parent=1 // pred_check_branch
      %24 = sbr.rel (0) target = $region13
    $region12: #{tpu_custom_call.1} parent=1 // pred_region
      %25 = dma.done [#allocation3], 512
    $region13: #{tpu_custom_call.1} parent=1 // pred_fallthru
      _
    %v26 = vld [vmem:[%s0] sm:$0xff]
    %v27 = vld [vmem:[%s0 + $0x8] sm:$0xff]
    %vm28 = vcmp.gt.s32.totalorder %v26, 0
    %v29 = vsel %vm28, %v26, 0
    %vm30 = vcmp.gt.s32.totalorder %v27, 0
    %v31 = vsel %vm30, %v27, 0
    %vm32 = vcmp.lt.s32.totalorder %v29, 31
    %v33 = vsel %vm32, %v29, 31
    %vm34 = vcmp.lt.s32.totalorder %v31, 31
    %v35 = vsel %vm34, %v31, 31
    %v36 = vlaneseq
    %v37 = vand.u32 %v36, 127
    %38 = vset.pattern.permute.xlu0 0
    %39 = vperm.xlu0 %38, %v33
    %v40 = vpop.permute.xlu0 %39
    %41 = vset.pattern.permute.xlu0 0
    %42 = vperm.xlu0 %41, %v35
    %v43 = vpop.permute.xlu0 %42
    %vm44 = vcmp.eq.s32.totalorder %v37, %v40
    %vm45 = vcmp.eq.s32.totalorder %v37, %v43
    %v46 = vsel %vm44, 1, 0
    %v47 = vsel %vm45, 1, 0
    %v48 = vcvt.s32.f32 %v46
    %v49 = vcvt.s32.f32 %v47
    %v50 = vld [vmem:[#allocation2] sm:$0xff]
    %v51 = vld [vmem:[#allocation2 + $0x8] sm:$0xff]
    %v52 = vld [vmem:[#allocation2 + $0x10] sm:$0xff]
    %v53 = vld [vmem:[#allocation2 + $0x18] sm:$0xff]
    %vm54 = vcmask 261120
    %v56 = vsel %vm54, %v48, 0
    %v59 = vsel %vm54, %v49, 0
    %61 = vmatprep.subr.mxu0 0.0
    %62 = vmatpush1.msra.mxu0 0.0
    %63 = vmatprep.subr.mxu0 0.0
    %64 = vmatpush1.msra.mxu0 0.0
    %65 = vmatprep.subr.mxu0 0.0
    %66 = vmatpush1.msra.mxu0 0.0
    %67 = vmatprep.subr.mxu0 0.0
    %68 = vmatpush1.msra.mxu0 0.0
    %69 = vmatprep.subr.mxu0 0.0
    %70 = vmatpush1.msra.mxu0 0.0
    %71 = vmatprep.subr.mxu0 0.0
    %72 = vmatpush1.msra.mxu0 0.0
    %73 = vmatprep.subr.mxu0 0.0
    %74 = vmatpush1.msra.mxu0 0.0
    %75 = vmatprep.subr.mxu0 0.0
    %76 = vmatpush1.msra.mxu0 0.0
    %77 = vmatprep.subr.mxu0 0.0
    %78 = vmatpush1.msra.mxu0 0.0
    %79 = vmatprep.subr.mxu0 0.0
    %80 = vmatpush1.msra.mxu0 0.0
    %81 = vmatprep.subr.mxu0 0.0
    %82 = vmatpush1.msra.mxu0 0.0
    %83 = vmatprep.subr.mxu0 0.0
    %84 = vmatpush1.msra.mxu0 0.0
    %85 = vmatprep.subr.mxu0 0.0
    %86 = vmatpush1.msra.mxu0 %v53
    %87 = vmatprep.subr.mxu0 0.0
    %88 = vmatpush1.msra.mxu0 %v52
    %89 = vmatprep.subr.mxu0 0.0
    %90 = vmatpush1.msra.mxu0 %v51
    %91 = vmatprep.subr.mxu0 0.0
    %92 = vmatpush1.msra.mxu0 %v50
    %93 = vmatprep.subr.mxu0 0.0
    %94 = vmatpush2.msra.mxu0 0.0
    %95 = vmatprep.subr.mxu0 0.0
    %96 = vmatpush2.msra.mxu0 0.0
    %97 = vmatprep.subr.mxu0 0.0
    %98 = vmatpush2.msra.mxu0 0.0
    %99 = vmatprep.subr.mxu0 0.0
    %100 = vmatpush2.msra.mxu0 0.0
    %101 = vmatprep.subr.mxu0 0.0
    %102 = vmatpush2.msra.mxu0 0.0
    %103 = vmatprep.subr.mxu0 0.0
    %104 = vmatpush2.msra.mxu0 0.0
    %105 = vmatprep.subr.mxu0 0.0
    %106 = vmatpush2.msra.mxu0 0.0
    %107 = vmatprep.subr.mxu0 0.0
    %108 = vmatpush2.msra.mxu0 0.0
    %109 = vmatprep.subr.mxu0 0.0
    %110 = vmatpush2.msra.mxu0 0.0
    %111 = vmatprep.subr.mxu0 0.0
    %112 = vmatpush2.msra.mxu0 0.0
    %113 = vmatprep.subr.mxu0 0.0
    %114 = vmatpush2.msra.mxu0 0.0
    %115 = vmatprep.subr.mxu0 0.0
    %116 = vmatpush2.msra.mxu0 0.0
    %117 = vmatprep.subr.mxu0 0.0
    %118 = vmatpush2.msra.mxu0 0.0
    %119 = vmatprep.subr.mxu0 0.0
    %120 = vmatpush2.msra.mxu0 0.0
    %121 = vmatprep.subr.mxu0 0.0
    %122 = vmatpush2.msra.mxu0 0.0
    %123 = vmatprep.subr.mxu0 0.0
    %124 = vmatpush2.msra.mxu0 0.0
    %125 = vmatprep.mubr.f32.mxu0 0.0
    %126 = vmatmul.mubr.f32.gmra.mxu0 %v56
    %v127 = vpop.f32.mrf.mxu0
    %v128 = vadd.f32 0.0, %v127
    %v129 = vpop.f32.mrf.mxu0
    %130 = vmatprep.mubr.f32.mxu0 0.0
    %131 = vmatmul.mubr.f32.gmra.mxu0 %v59
    %v132 = vpop.f32.mrf.mxu0
    %v133 = vadd.f32 0.0, %v132
    %v134 = vpop.f32.mrf.mxu0
    %135 = vdwg.mxu0
    %v136 = vmul.f32 %v128, 11.313708
    %v137 = vmul.f32 %v133, 11.313708
    %138 = vst [vmem:[#allocation5] sm:$0xff] %v136
    %139 = vst [vmem:[#allocation5 + $0x8] sm:$0xff] %v137
    // Predicated region
    $region14: #{tpu_custom_call.1} parent=1 // pred_check
      _
    $region15: #{tpu_custom_call.1} parent=1 // pred_check_branch
      %141 = sbr.rel (0) target = $region17
    $region16: #{tpu_custom_call.1} parent=1 // pred_region
      %s143 = ssub.s32 256, 256
      %144 = vsyncadd [#allocation4], %s143
      %s145 = sshll.u32 [#allocation5], 4
      %s146 = int_to_ptr.vmem [resolvable:$true] %s145
      %151 = dma.vmem_to_hbm [thread:$0]  %s146, 256, %s2, [#allocation4], 128, 128, 8
    $region17: #{tpu_custom_call.1} parent=1 // pred_fallthru
      _
    // Predicated region
    $region18: #{tpu_custom_call.1} parent=1 // pred_check
      _
    $region19: #{tpu_custom_call.1} parent=1 // pred_check_branch
      %153 = sbr.rel (0) target = $region21
    $region20: #{tpu_custom_call.1} parent=1 // pred_region
      %154 = dma.done [#allocation4], 256
    $region21: #{tpu_custom_call.1} parent=1 // pred_fallthru
      _
    %155 = vsyncpa [#allocation3], 1
    %156 = vsyncpa [#allocation4], 1

// kernel: tpu_custom_call.1
$region0: #{tpu_custom_call.1}
  #allocation0 [shape = 'u32[]', space=smem, size = 0x4, offset = 0x4, fixed_abs, tag = 'smem constant byte address 0x4 - core index']
  #allocation1 [shape = 'u32[144,128]{1,0:T(1,128)}', space=vmem, size = 0x12000, scoped, tag = 'internal scratch']
  %s0 = inlined_call_operand.vmem [shape: s32[16,1], index: 0, kind: input, shape index: {}]
  %s1 = inlined_call_operand.hbm [shape: f32[32,128], index: 1, kind: input, shape index: {}]
  %s2 = inlined_call_operand.hbm [shape: f32[16,128], index: 2, kind: output, shape index: {}]
  %s3 = sld [smem:[#allocation0]]
  $region22: #{tpu_custom_call.1} parent=0
    _
  %s5 = ssub.s32 1, %s3
  %s6 = scalar_select 0, %s5, %s3
  $region1: #{tpu_custom_call.1} parent=0
    #allocation2 [shape = 'u8[16384]{0}', space=vmem, size = 0x4000, scoped, tag = 'input window, operand 1, single buffered']
    #allocation3 [shape = 's32[1]{0}', space=sflag, size = 0x4, scoped, tag = 'scoped memory for tpu_custom_call.1']
    #allocation4 [shape = 's32[1]{0}', space=sflag, size = 0x4, scoped, tag = 'scoped memory for tpu_custom_call.1']
    #allocation5 [shape = 'u8[8192]{0}', space=vmem, size = 0x2000, scoped, tag = 'output window, operand 0, single buffered']
    %7 = vsyncpa [#allocation3], 0
    %8 = vsyncpa [#allocation4], 0
    // Predicated region
    $region2: #{tpu_custom_call.1} parent=1 // pred_check
      _
    $region3: #{tpu_custom_call.1} parent=1 // pred_check_branch
      %10 = sbr.rel (0) target = $region5
    $region4: #{tpu_custom_call.1} parent=1 // pred_region
      _
    $region5: #{tpu_custom_call.1} parent=1 // pred_fallthru
      _
    // Predicated region
    $region6: #{tpu_custom_call.1} parent=1 // pred_check
      _
    $region7: #{tpu_custom_call.1} parent=1 // pred_check_branch
      %12 = sbr.rel (0) target = $region9
    $region8: #{tpu_custom_call.1} parent=1 // pred_region
      %s14 = ssub.s32 512, 512
      %15 = vsyncadd [#allocation3], %s14
      %s16 = sshll.u32 [#allocation2], 4
      %s17 = int_to_ptr.vmem [resolvable:$true] %s16
      %22 = dma.hbm_to_vmem [thread:$0]  %s1, 512, %s17, [#allocation3], 128, 128, 8
    $region9: #{tpu_custom_call.1} parent=1 // pred_fallthru
      _
    // Predicated region
    $region10: #{tpu_custom_call.1} parent=1 // pred_check
      _
    $region11: #{tpu_custom_call.1} parent=1 // pred_check_branch
      %24 = sbr.rel (0) target = $region13
    $region12: #{tpu_custom_call.1} parent=1 // pred_region
      %25 = dma.done [#allocation3], 512
    $region13: #{tpu_custom_call.1} parent=1 // pred_fallthru
      _
    %v26 = vld [vmem:[%s0] sm:$0xff]
    %v27 = vld [vmem:[%s0 + $0x8] sm:$0xff]
    %vm28 = vcmp.gt.s32.totalorder %v26, 0
    %v29 = vsel %vm28, %v26, 0
    %vm30 = vcmp.gt.s32.totalorder %v27, 0
    %v31 = vsel %vm30, %v27, 0
    %vm32 = vcmp.lt.s32.totalorder %v29, 31
    %v33 = vsel %vm32, %v29, 31
    %vm34 = vcmp.lt.s32.totalorder %v31, 31
    %v35 = vsel %vm34, %v31, 31
    %v36 = vlaneseq
    %v37 = vand.u32 %v36, 127
    %38 = vset.pattern.permute.xlu0 0
    %39 = vperm.xlu0 %38, %v33
    %v40 = vpop.permute.xlu0 %39
    %41 = vset.pattern.permute.xlu0 0
    %42 = vperm.xlu0 %41, %v35
    %v43 = vpop.permute.xlu0 %42
    %vm44 = vcmp.eq.s32.totalorder %v37, %v40
    %vm45 = vcmp.eq.s32.totalorder %v37, %v43
    %v46 = vsel %vm44, 1, 0
    %v47 = vsel %vm45, 1, 0
    %v48 = vcvt.s32.f32 %v46
    %v49 = vcvt.s32.f32 %v47
    %v50 = vld [vmem:[#allocation2] sm:$0xff]
    %v51 = vld [vmem:[#allocation2 + $0x8] sm:$0xff]
    %v52 = vld [vmem:[#allocation2 + $0x10] sm:$0xff]
    %v53 = vld [vmem:[#allocation2 + $0x18] sm:$0xff]
    %vm54 = vcmask 261120
    %v56 = vsel %vm54, %v48, 0
    %v59 = vsel %vm54, %v49, 0
    %61 = vmatprep.subr.mxu0 0.0
    %62 = vmatpush1.msra.mxu0 0.0
    %63 = vmatprep.subr.mxu0 0.0
    %64 = vmatpush1.msra.mxu0 0.0
    %65 = vmatprep.subr.mxu0 0.0
    %66 = vmatpush1.msra.mxu0 0.0
    %67 = vmatprep.subr.mxu0 0.0
    %68 = vmatpush1.msra.mxu0 0.0
    %69 = vmatprep.subr.mxu0 0.0
    %70 = vmatpush1.msra.mxu0 0.0
    %71 = vmatprep.subr.mxu0 0.0
    %72 = vmatpush1.msra.mxu0 0.0
    %73 = vmatprep.subr.mxu0 0.0
    %74 = vmatpush1.msra.mxu0 0.0
    %75 = vmatprep.subr.mxu0 0.0
    %76 = vmatpush1.msra.mxu0 0.0
    %77 = vmatprep.subr.mxu0 0.0
    %78 = vmatpush1.msra.mxu0 0.0
    %79 = vmatprep.subr.mxu0 0.0
    %80 = vmatpush1.msra.mxu0 0.0
    %81 = vmatprep.subr.mxu0 0.0
    %82 = vmatpush1.msra.mxu0 0.0
    %83 = vmatprep.subr.mxu0 0.0
    %84 = vmatpush1.msra.mxu0 0.0
    %85 = vmatprep.subr.mxu0 0.0
    %86 = vmatpush1.msra.mxu0 %v53
    %87 = vmatprep.subr.mxu0 0.0
    %88 = vmatpush1.msra.mxu0 %v52
    %89 = vmatprep.subr.mxu0 0.0
    %90 = vmatpush1.msra.mxu0 %v51
    %91 = vmatprep.subr.mxu0 0.0
    %92 = vmatpush1.msra.mxu0 %v50
    %93 = vmatprep.subr.mxu0 0.0
    %94 = vmatpush2.msra.mxu0 0.0
    %95 = vmatprep.subr.mxu0 0.0
    %96 = vmatpush2.msra.mxu0 0.0
    %97 = vmatprep.subr.mxu0 0.0
    %98 = vmatpush2.msra.mxu0 0.0
    %99 = vmatprep.subr.mxu0 0.0
    %100 = vmatpush2.msra.mxu0 0.0
    %101 = vmatprep.subr.mxu0 0.0
    %102 = vmatpush2.msra.mxu0 0.0
    %103 = vmatprep.subr.mxu0 0.0
    %104 = vmatpush2.msra.mxu0 0.0
    %105 = vmatprep.subr.mxu0 0.0
    %106 = vmatpush2.msra.mxu0 0.0
    %107 = vmatprep.subr.mxu0 0.0
    %108 = vmatpush2.msra.mxu0 0.0
    %109 = vmatprep.subr.mxu0 0.0
    %110 = vmatpush2.msra.mxu0 0.0
    %111 = vmatprep.subr.mxu0 0.0
    %112 = vmatpush2.msra.mxu0 0.0
    %113 = vmatprep.subr.mxu0 0.0
    %114 = vmatpush2.msra.mxu0 0.0
    %115 = vmatprep.subr.mxu0 0.0
    %116 = vmatpush2.msra.mxu0 0.0
    %117 = vmatprep.subr.mxu0 0.0
    %118 = vmatpush2.msra.mxu0 0.0
    %119 = vmatprep.subr.mxu0 0.0
    %120 = vmatpush2.msra.mxu0 0.0
    %121 = vmatprep.subr.mxu0 0.0
    %122 = vmatpush2.msra.mxu0 0.0
    %123 = vmatprep.subr.mxu0 0.0
    %124 = vmatpush2.msra.mxu0 0.0
    %125 = vmatprep.mubr.f32.mxu0 0.0
    %126 = vmatmul.mubr.f32.gmra.mxu0 %v56
    %v127 = vpop.f32.mrf.mxu0
    %v128 = vadd.f32 0.0, %v127
    %v129 = vpop.f32.mrf.mxu0
    %130 = vmatprep.mubr.f32.mxu0 0.0
    %131 = vmatmul.mubr.f32.gmra.mxu0 %v59
    %v132 = vpop.f32.mrf.mxu0
    %v133 = vadd.f32 0.0, %v132
    %v134 = vpop.f32.mrf.mxu0
    %135 = vdwg.mxu0
    %v136 = vmul.f32 %v128, 11.313708
    %v137 = vmul.f32 %v133, 11.313708
    %138 = vst [vmem:[#allocation5] sm:$0xff] %v136
    %139 = vst [vmem:[#allocation5 + $0x8] sm:$0xff] %v137
    // Predicated region
    $region14: #{tpu_custom_call.1} parent=1 // pred_check
      _
    $region15: #{tpu_custom_call.1} parent=1 // pred_check_branch
      %141 = sbr.rel (0) target = $region17
    $region16: #{tpu_custom_call.1} parent=1 // pred_region
      %s143 = ssub.s32 256, 256
      %144 = vsyncadd [#allocation4], %s143
      %s145 = sshll.u32 [#allocation5], 4
      %s146 = int_to_ptr.vmem [resolvable:$true] %s145
      %151 = dma.vmem_to_hbm [thread:$0]  %s146, 256, %s2, [#allocation4], 128, 128, 8
    $region17: #{tpu_custom_call.1} parent=1 // pred_fallthru
      _
    // Predicated region
    $region18: #{tpu_custom_call.1} parent=1 // pred_check
      _
    $region19: #{tpu_custom_call.1} parent=1 // pred_check_branch
      %153 = sbr.rel (0) target = $region21
    $region20: #{tpu_custom_call.1} parent=1 // pred_region
      %154 = dma.done [#allocation4], 256
    $region21: #{tpu_custom_call.1} parent=1 // pred_fallthru
      _
    %155 = vsyncpa [#allocation3], 1
    %156 = vsyncpa [#allocation4], 1

</llo_original>
